<compile_context>
chip_gen: v6e
topology: v6e:2x2x1
jax: 0.10.0
libtpu: 0.0.40
codegen_flags: <defaults>
</compile_context>

<pallas_src>
import jax
import jax.numpy as jnp
from jax.experimental import pallas as pl
from jax.experimental.pallas import tpu as pltpu

MiB = 1024 * 1024


def _vmem_capacity_bytes() -> int:
    """Physical VMEM per core, with a conservative (v7x-sized) fallback."""
    try:
        cap = getattr(pltpu.get_tpu_info(), "vmem_capacity_bytes", None)
        if cap:
            return int(cap)
    except Exception:
        pass
    return 64 * MiB


def _shrink_axis(extent: int, align: int, unit_bytes: int, budget: int) -> int:
    """Largest aligned-or-full tile along one axis s.t. tile*unit_bytes <= budget."""
    if extent * unit_bytes <= budget:
        return extent
    t = (budget // max(unit_bytes, 1)) // align * align
    t = max(t, align)
    return min(t, extent)


def _make_gap_kernel(reduce_axis: int, reduce_extent: int, reduce_tile: int):
    inv_n = 1.0 / float(reduce_extent)
    needs_mask = (reduce_extent % reduce_tile) != 0

    def kernel(x_ref, o_ref, acc_ref):
        r = pl.program_id(2)
        last = pl.num_programs(2) - 1

        @pl.when(r == 0)
        def _init():
            acc_ref[...] = jnp.zeros_like(acc_ref)

        def accumulate(mask_edge: bool):
            x = x_ref[...]
            if mask_edge:
                pos = jax.lax.broadcasted_iota(jnp.int32, x.shape, reduce_axis)
                valid = (r * reduce_tile + pos) < reduce_extent
                x = jnp.where(valid, x, jnp.zeros_like(x))
            # fp32 accumulation without materializing a full fp32 copy of the
            # block (matters for bf16 inputs and VMEM headroom).
            acc_ref[...] += jnp.sum(x, axis=reduce_axis, dtype=jnp.float32)

        if needs_mask:
            # Steady state: unmasked.  Edge mask only on the final reduce step.
            @pl.when(r < last)
            def _steady():
                accumulate(False)

            @pl.when(r == last)
            def _edge():
                accumulate(True)
        else:
            accumulate(False)

        @pl.when(r == last)
        def _finalize():
            o_ref[...] = (acc_ref[...] * inv_n).astype(o_ref.dtype)

    return kernel


def global_average_pooling_1d(x: jax.Array, dim: int = 1) -> jax.Array:
    """Pallas implementation of torch.mean(x, dim=dim) for a 3D input."""
    assert x.ndim == 3, "expected a 3D input"
    assert jnp.issubdtype(x.dtype, jnp.floating), "mean over float inputs only"
    dim = dim % 3
    k0, k1 = tuple(a for a in range(3) if a != dim)
    shape = x.shape

    itemsize = jnp.dtype(x.dtype).itemsize
    sublane = 8 * max(1, 4 // itemsize)          # 8 f32 / 16 bf16 rows

    # Alignment per input axis: the input block's last two dims and the
    # (kept0, kept1) output block must be (8,128)-aligned or full-extent.
    align = [1, sublane, 128]
    align[k0] = max(align[k0], sublane)          # kept0 -> output sublane axis
    align[k1] = max(align[k1], 128)              # kept1 -> output lane axis

    # Per-generation streaming-block byte budget and scoped-VMEM limit.
    vmem_cap = _vmem_capacity_bytes()
    if vmem_cap >= 96 * MiB:                     # v5e / v6e: 128 MiB physical VMEM
        block_budget = 16 * MiB
        vmem_limit = 64 * MiB
    else:                                        # v7x-class: 64 MiB physical VMEM
        block_budget = 8 * MiB
        vmem_limit = 44 * MiB

    # Start from one full-array block; shrink axes (reduce axis first, then the
    # kept sublane axis, kept lane axis last) until the block fits the budget.
    tiles = list(shape)
    for ax in (dim, k0, k1):
        blk_bytes = tiles[0] * tiles[1] * tiles[2] * itemsize
        if blk_bytes <= block_budget:
            break
        unit = blk_bytes // tiles[ax]
        tiles[ax] = _shrink_axis(shape[ax], align[ax], unit, block_budget)

    # v7x megacore: if the kept (parallel) grid has a single point but the
    # reduction runs multiple steps, halve a kept tile (only while it stays
    # aligned) so the two TensorCores can split the output space.
    kept_grid = pl.cdiv(shape[k0], tiles[k0]) * pl.cdiv(shape[k1], tiles[k1])
    if kept_grid == 1 and pl.cdiv(shape[dim], tiles[dim]) > 1:
        if tiles[k1] % (2 * align[k1]) == 0:
            tiles[k1] //= 2
        elif tiles[k0] % (2 * align[k0]) == 0:
            tiles[k0] //= 2

    # Make sure the scoped-VMEM limit covers the double-buffered block plus the
    # fp32 accumulator and output buffers (never above physical capacity).
    blk_bytes = tiles[0] * tiles[1] * tiles[2] * itemsize
    out_block = (tiles[k0], tiles[k1])
    needed = (2 * blk_bytes
              + 2 * out_block[0] * out_block[1] * itemsize
              + out_block[0] * out_block[1] * 4
              + 4 * MiB)
    vmem_limit = min(max(vmem_limit, needed), vmem_cap)

    grid = (
        pl.cdiv(shape[k0], tiles[k0]),
        pl.cdiv(shape[k1], tiles[k1]),
        pl.cdiv(shape[dim], tiles[dim]),         # reduction axis LAST
    )

    def in_index_map(g0, g1, g2):
        idx = [0, 0, 0]
        idx[k0], idx[k1], idx[dim] = g0, g1, g2
        return tuple(idx)

    def out_index_map(g0, g1, g2):
        return (g0, g1)                          # same output block across reduce axis

    kernel = _make_gap_kernel(dim, shape[dim], tiles[dim])

    return pl.pallas_call(
        kernel,
        out_shape=jax.ShapeDtypeStruct((shape[k0], shape[k1]), x.dtype),
        grid_spec=pltpu.PrefetchScalarGridSpec(
            num_scalar_prefetch=0,
            grid=grid,
            in_specs=[pl.BlockSpec(tuple(tiles), in_index_map)],
            out_specs=pl.BlockSpec(out_block, out_index_map),
            scratch_shapes=[pltpu.VMEM(out_block, jnp.float32)],
        ),
        compiler_params=pltpu.CompilerParams(
            dimension_semantics=("parallel", "parallel", "arbitrary"),
            vmem_limit_bytes=int(vmem_limit),
        ),
    )(x)


if __name__ == "__main__":
    key0, key1 = jax.random.split(jax.random.PRNGKey(0))

    # Module under test: GlobalAveragePooling1D(dim=1) on a small (B, T, C) input.
    B, T, C = 2, 8, 32
    x = jax.random.normal(key0, (B, T, C), dtype=jnp.float32)
    out = jax.block_until_ready(global_average_pooling_1d(x, dim=1))
    ref = jnp.mean(x, axis=1)
    assert out.shape == ref.shape and out.dtype == x.dtype
    assert jnp.allclose(out, ref, atol=1e-5, rtol=1e-5)

    # Other reduction dims (routed purely via index_map — no wrapper transpose).
    for d in (0, 2):
        o = jax.block_until_ready(global_average_pooling_1d(x, dim=d))
        assert jnp.allclose(o, jnp.mean(x, axis=d), atol=1e-5, rtol=1e-5)

    # Larger case exceeding the block budget: exercises the multi-step reduce
    # grid, the resident fp32 accumulator, the last-step edge mask and the
    # kept-tile halving (megacore) path.
    x2 = jax.random.normal(key1, (4, 2600, 768), dtype=jnp.float32)
    o2 = jax.block_until_ready(global_average_pooling_1d(x2, dim=1))
    assert jnp.allclose(o2, jnp.mean(x2, axis=1), atol=1e-5, rtol=1e-5)

    print("KERNEL_OK")
</pallas_src>

<mosaic_0001>
module attributes {stable_mosaic.version = 11 : i64} {
  func.func @kernel(%arg0: i32, %arg1: i32, %arg2: i32, %arg3: memref<2x8x32xf32, #tpu.memory_space<vmem>>, %arg4: memref<2x32xf32, #tpu.memory_space<vmem>>, %arg5: memref<2x32xf32, #tpu.memory_space<vmem>>) attributes {dimension_semantics = [#tpu.dimension_semantics<parallel>, #tpu.dimension_semantics<parallel>, #tpu.dimension_semantics<arbitrary>], iteration_bounds = array<i64: 1, 1, 1>, scalar_prefetch = 0 : i64, scratch_operands = 1 : i64, tpu.core_type = #tpu.core_type<tc>, window_params = [{transform_indices = @transform_0, window_bounds = array<i64: 2, 8, 32>}, {transform_indices = @transform_1, window_bounds = array<i64: 2, 32>}]} {
    %c0_i32 = arith.constant 0 : i32
    %0 = arith.cmpi eq, %arg2, %c0_i32 : i32
    %1 = arith.extui %0 : i1 to i32
    %c0_i32_0 = arith.constant 0 : i32
    %2 = arith.cmpi ne, %1, %c0_i32_0 : i32
    scf.if %2 {
      %cst_9 = arith.constant 0.000000e+00 : f32
      %11 = vector.broadcast %cst_9 : f32 to vector<2x32xf32>
      %c0_10 = arith.constant 0 : index
      %c0_11 = arith.constant 0 : index
      %12 = vector.load %arg5[%c0_10, %c0_11] : memref<2x32xf32, #tpu.memory_space<vmem>>, vector<2x32xf32>
      tpu.vector_store %arg5[%c0_10, %c0_11], %11 {strides = array<i32>} : memref<2x32xf32, #tpu.memory_space<vmem>>, vector<2x32xf32>,
    } else {
    }
    %c0 = arith.constant 0 : index
    %c0_1 = arith.constant 0 : index
    %c0_2 = arith.constant 0 : index
    %3 = vector.load %arg3[%c0, %c0_1, %c0_2] : memref<2x8x32xf32, #tpu.memory_space<vmem>>, vector<2x8x32xf32>
    %c0_3 = arith.constant 0 : index
    %c0_4 = arith.constant 0 : index
    %4 = vector.load %arg5[%c0_3, %c0_4] : memref<2x32xf32, #tpu.memory_space<vmem>>, vector<2x32xf32>
    %cst = arith.constant dense<0.000000e+00> : vector<2x32xf32>
    %5 = vector.multi_reduction <add>, %3, %cst [1] : vector<2x8x32xf32> to vector<2x32xf32>
    %6 = arith.addf %4, %5 : vector<2x32xf32>
    %c0_5 = arith.constant 0 : index
    %c0_6 = arith.constant 0 : index
    %7 = vector.load %arg5[%c0_5, %c0_6] : memref<2x32xf32, #tpu.memory_space<vmem>>, vector<2x32xf32>
    tpu.vector_store %arg5[%c0_5, %c0_6], %6 {strides = array<i32>} : memref<2x32xf32, #tpu.memory_space<vmem>>, vector<2x32xf32>,
    %c0_i32_7 = arith.constant 0 : i32
    %8 = arith.cmpi eq, %arg2, %c0_i32_7 : i32
    %9 = arith.extui %8 : i1 to i32
    %c0_i32_8 = arith.constant 0 : i32
    %10 = arith.cmpi ne, %9, %c0_i32_8 : i32
    scf.if %10 {
      %c0_9 = arith.constant 0 : index
      %c0_10 = arith.constant 0 : index
      %11 = vector.load %arg5[%c0_9, %c0_10] : memref<2x32xf32, #tpu.memory_space<vmem>>, vector<2x32xf32>
      %cst_11 = arith.constant 1.250000e-01 : f32
      %12 = vector.broadcast %cst_11 : f32 to vector<2x32xf32>
      %13 = arith.mulf %11, %12 : vector<2x32xf32>
      %c0_12 = arith.constant 0 : index
      %c0_13 = arith.constant 0 : index
      %14 = vector.load %arg4[%c0_12, %c0_13] : memref<2x32xf32, #tpu.memory_space<vmem>>, vector<2x32xf32>
      tpu.vector_store %arg4[%c0_12, %c0_13], %13 {strides = array<i32>} : memref<2x32xf32, #tpu.memory_space<vmem>>, vector<2x32xf32>,
    } else {
    }
    return
  }
  func.func @transform_0(%arg0: i32, %arg1: i32, %arg2: i32) -> (i32, i32, i32) {
    %c0_i32 = arith.constant 0 : i32
    return %arg0, %arg2, %arg1 : i32, i32, i32
  }
  func.func @transform_1(%arg0: i32, %arg1: i32, %arg2: i32) -> (i32, i32) {
    %c0_i32 = arith.constant 0 : i32
    return %arg0, %arg1 : i32, i32
  }
}

</mosaic_0001>

<llo_original>
// kernel: tpu_custom_call.1
$region0: #{tpu_custom_call.1}
  #allocation0 [shape = 'u32[]', space=smem, size = 0x4, offset = 0x4, fixed_abs, tag = 'smem constant byte address 0x4 - core index']
  #allocation1 [shape = 'u32[144,128]{1,0:T(1,128)}', space=vmem, size = 0x12000, scoped, tag = 'internal scratch']
  #allocation2 [shape = 'f32[2,32]{1,0:T(2,128)}', space=vmem, size = 0x400, scoped, tag = 'scratch operand']
  %s0 = inlined_call_operand.hbm [shape: f32[2,8,32], index: 0, kind: input, shape index: {}]
  %s1 = inlined_call_operand.hbm [shape: f32[2,32], index: 1, kind: output, shape index: {}]
  %s2 = sld [smem:[#allocation0]]
  $region26: #{tpu_custom_call.1} parent=0
    _
  %s4 = ssub.s32 1, %s2
  %s5 = scalar_select 0, %s4, %s2
  $region1: #{tpu_custom_call.1} parent=0
    #allocation3 [shape = 'u8[8192]{0}', space=vmem, size = 0x2000, scoped, tag = 'input window, operand 0, single buffered']
    #allocation4 [shape = 's32[1]{0}', space=sflag, size = 0x4, scoped, tag = 'scoped memory for tpu_custom_call.1']
    #allocation5 [shape = 's32[1]{0}', space=sflag, size = 0x4, scoped, tag = 'scoped memory for tpu_custom_call.1']
    #allocation6 [shape = 'u8[1024]{0}', space=vmem, size = 0x400, scoped, tag = 'output window, operand 0, single buffered']
    %6 = vsyncpa [#allocation4], 0
    %7 = vsyncpa [#allocation5], 0
    // Predicated region
    $region2: #{tpu_custom_call.1} parent=1 // pred_check
      _
    $region3: #{tpu_custom_call.1} parent=1 // pred_check_branch
      %9 = sbr.rel (0) target = $region5
    $region4: #{tpu_custom_call.1} parent=1 // pred_region
      %s11 = ssub.s32 256, 256
      %12 = vsyncadd [#allocation4], %s11
      %s13 = sshll.u32 [#allocation3], 4
      %s14 = int_to_ptr.vmem [resolvable:$true] %s13
      %19 = dma.hbm_to_vmem [thread:$0]  %s0, 256, %s14, [#allocation4], 128, 128, 8
    $region5: #{tpu_custom_call.1} parent=1 // pred_fallthru
      _
    // Predicated region
    $region6: #{tpu_custom_call.1} parent=1 // pred_check
      _
    $region7: #{tpu_custom_call.1} parent=1 // pred_check_branch
      %21 = sbr.rel (0) target = $region9
    $region8: #{tpu_custom_call.1} parent=1 // pred_region
      %22 = dma.done [#allocation4], 256
    $region9: #{tpu_custom_call.1} parent=1 // pred_fallthru
      _
    %p23 = scmp.eq.s32.totalorder 0, 0
    // Predicated region
    $region10: #{tpu_custom_call.1} parent=1 // pred_check
      %p24 = pneg %p23
    $region11: #{tpu_custom_call.1} parent=1 // pred_check_branch
      %26 = sbr.rel (%p24) target = $region13
    $region12: #{tpu_custom_call.1} parent=1 // pred_region
      %vm27 = vcmask 254976
      %28 = vst.msk [vmem:[#allocation2] sm:$0x3] %vm27, 0.0
    $region13: #{tpu_custom_call.1} parent=1 // pred_fallthru
      _
    %v29 = vld [vmem:[#allocation3] sm:$0xff]
    %v30 = vld [vmem:[#allocation3 + $0x8] sm:$0xff]
    %v31 = vld [vmem:[#allocation2] sm:$0x3]
    %vm32 = vcmask 261120
    %v33 = vsel %vm32, %v29, 0.0
    %v34 = vrot.slane %v33, 4
    %v35 = vadd.f32 %v33, %v34
    %v36 = vrot.slane %v35, 2
    %v37 = vadd.f32 %v35, %v36
    %v38 = vrot.slane %v37, 1
    %v39 = vadd.f32 %v37, %v38
    %v40 = vsel %vm32, %v30, 0.0
    %v41 = vrot.slane %v40, 4
    %v42 = vadd.f32 %v40, %v41
    %v43 = vrot.slane %v42, 2
    %v44 = vadd.f32 %v42, %v43
    %v45 = vrot.slane %v44, 1
    %v46 = vadd.f32 %v44, %v45
    %vm49 = vcmask 1041409
    %v50 = vsel %vm49, %v46, %v39
    %v52 = vadd.f32 %v31, %v50
    %vm53 = vcmask 254976
    %54 = vst.msk [vmem:[#allocation2] sm:$0x3] %vm53, %v52
    // Predicated region
    $region14: #{tpu_custom_call.1} parent=1 // pred_check
      %p55 = pneg %p23
    $region15: #{tpu_custom_call.1} parent=1 // pred_check_branch
      %57 = sbr.rel (%p55) target = $region17
    $region16: #{tpu_custom_call.1} parent=1 // pred_region
      %v58 = vld [vmem:[#allocation2] sm:$0x3]
      %v59 = vmul.f32 %v58, 0.125
      %60 = vst.msk [vmem:[#allocation6] sm:$0x3] %vm53, %v59
    $region17: #{tpu_custom_call.1} parent=1 // pred_fallthru
      _
    // Predicated region
    $region18: #{tpu_custom_call.1} parent=1 // pred_check
      _
    $region19: #{tpu_custom_call.1} parent=1 // pred_check_branch
      %62 = sbr.rel (0) target = $region21
    $region20: #{tpu_custom_call.1} parent=1 // pred_region
      %s64 = ssub.s32 32, 32
      %65 = vsyncadd [#allocation5], %s64
      %s67 = sshll.u32 [#allocation6], 4
      %s68 = int_to_ptr.vmem [resolvable:$true] %s67
      %70 = dma.vmem_to_hbm [thread:$0]  %s68, 32, %s1, [#allocation5]
    $region21: #{tpu_custom_call.1} parent=1 // pred_fallthru
      _
    // Predicated region
    $region22: #{tpu_custom_call.1} parent=1 // pred_check
      _
    $region23: #{tpu_custom_call.1} parent=1 // pred_check_branch
      %72 = sbr.rel (0) target = $region25
    $region24: #{tpu_custom_call.1} parent=1 // pred_region
      %73 = dma.done [#allocation5], 32
    $region25: #{tpu_custom_call.1} parent=1 // pred_fallthru
      _
    %74 = vsyncpa [#allocation4], 1
    %75 = vsyncpa [#allocation5], 1

</llo_original>
